<compile_context>
chip_gen: v6e
topology: v6e:2x2x1
jax: 0.10.0
libtpu: 0.0.40
codegen_flags: <defaults>
</compile_context>

<pallas_src>
import jax
import jax.numpy as jnp
from jax import lax
from jax.experimental import pallas as pl
from jax.experimental.pallas import tpu as pltpu

INFLUENCE_FACTOR = 40.0
WEIGHT_FACTOR = 0.5
_LANES = 128


# --------------------------------------------------------------------------
# Kernel: pure streamed elementwise add (memory-bound on decoder_outputs).
# --------------------------------------------------------------------------
def _fusion_kernel(slab_ref, dec_ref, out_ref):
    # slab_ref: (B, lanes) resident; dec_ref/out_ref: (B, t_tile, lanes) streamed.
    out_ref[...] = dec_ref[...] + slab_ref[...][:, None, :]


# --------------------------------------------------------------------------
# Wrapper-side (grid-invariant) slab computation — tiny, stays in XLA.
# --------------------------------------------------------------------------
def _compute_slab(preference_vector, w_pref, b_pref, w_sig, b_sig):
    p = (preference_vector.astype(jnp.float32) @ w_pref.astype(jnp.float32)
         + b_pref.astype(jnp.float32))                               # (B, F)
    # Amplify: columns 0 and 1 of EVERY row <- row-0's values * influence
    # (matches preference_vector[:, 0] = x1*IF ; [:, 1] = x2*IF).
    row0_amp = p[0:1, :] * INFLUENCE_FACTOR                          # (1, F)
    col = lax.broadcasted_iota(jnp.int32, p.shape, 1)                # (B, F)
    p = jnp.where(col <= 1, jnp.broadcast_to(row0_amp, p.shape), p)
    sig = jax.nn.sigmoid(p @ w_sig.astype(jnp.float32)
                         + b_sig.astype(jnp.float32))                # (B, F)
    return WEIGHT_FACTOR * sig * p                                   # (B, F)


def _vmem_capacity_bytes(default=64 * 1024 * 1024):
    """Best-effort query of physical VMEM; conservative fallback (v7x-sized)."""
    try:
        info = pltpu.get_tpu_info()
    except Exception:
        return default
    for name in ("vmem_capacity_bytes", "vmem_size_bytes", "vmem_bytes"):
        v = getattr(info, name, None)
        if isinstance(v, int) and v > 0:
            return v
    return default


def _choose_row_tile(n_rows, bytes_per_row, sub_mult, target_bytes, min_steps=4):
    """Pick the streamed row-tile: dtype-legal sublane multiple, sized against
    the per-generation byte target, keeping >= min_steps grid steps so v7x's
    two TensorCores both get work. Full axis if it's tiny / can't be split."""
    if n_rows < 2 * sub_mult or n_rows * bytes_per_row <= (1 << 20):
        return n_rows                                   # whole axis (legal)
    t = max(sub_mult, (target_bytes // bytes_per_row) // sub_mult * sub_mult)
    cap = max(sub_mult, (pl.cdiv(n_rows, min_steps) // sub_mult) * sub_mult)
    t = min(t, cap)
    return min(t, n_rows)


def preference_fusion(decoder_outputs, preference_vector,
                      w_pref, b_pref, w_sig, b_sig, *, in_place=False):
    """decoder_outputs: (B, T, F); preference_vector: (B, D_in).
       w_pref: (D_in, F), b_pref: (1, F), w_sig: (F, F), b_sig: (1, F).
       Set in_place=True only if the caller donates decoder_outputs."""
    B, T, F = decoder_outputs.shape
    itemsize = jnp.dtype(decoder_outputs.dtype).itemsize
    sub_mult = 8 * max(1, 4 // itemsize)        # 8 (f32) / 16 (bf16) / 32 (i8)

    # Lane-dense packing of the F axis up to 128 lanes when it packs cleanly.
    if F < _LANES and _LANES % F == 0 and (T * F) % _LANES == 0:
        lanes, rep = _LANES, _LANES // F
    else:
        lanes, rep = F, 1
    n_rows = (T * F) // lanes
    dec = decoder_outputs.reshape(B, n_rows, lanes)

    # Grid-invariant slab, computed once; cast to the decoder dtype so the
    # streamed add stays in that dtype (bf16 add on v6e/v7x).
    slab = _compute_slab(preference_vector, w_pref, b_pref, w_sig, b_sig)
    if rep > 1:
        slab = jnp.tile(slab, (1, rep))                              # (B, lanes)
    slab = slab.astype(decoder_outputs.dtype)

    # Generation-aware VMEM budget / tile byte target.
    vmem_cap = _vmem_capacity_bytes()
    vmem_limit = max(32 << 20, min(int(vmem_cap * 3 // 4), 96 << 20))
    target_tile_bytes = min(16 << 20, max(2 << 20, (vmem_limit - (4 << 20)) // 4))

    bytes_per_row = B * lanes * itemsize
    t_tile = _choose_row_tile(n_rows, bytes_per_row, sub_mult, target_tile_bytes)
    grid = (pl.cdiv(n_rows, t_tile),)           # ragged last block is fine

    cost = pl.CostEstimate(
        flops=B * T * F,
        transcendentals=0,
        bytes_accessed=2 * B * T * F * itemsize + B * lanes * itemsize)

    out = pl.pallas_call(
        _fusion_kernel,
        out_shape=jax.ShapeDtypeStruct((B, n_rows, lanes),
                                       decoder_outputs.dtype),
        grid=grid,
        in_specs=[
            pl.BlockSpec((B, lanes), lambda i: (0, 0)),              # resident
            pl.BlockSpec((B, t_tile, lanes), lambda i: (0, i, 0)),   # streamed
        ],
        out_specs=pl.BlockSpec((B, t_tile, lanes), lambda i: (0, i, 0)),
        input_output_aliases=({1: 0} if in_place else {}),
        compiler_params=pltpu.CompilerParams(
            dimension_semantics=("parallel",),                       # megacore
            vmem_limit_bytes=vmem_limit),
        cost_estimate=cost,
    )(slab, dec)

    return out.reshape(B, T, F)


# --------------------------------------------------------------------------
# Pure-JAX reference (mirrors the PyTorch forward).
# --------------------------------------------------------------------------
def _reference(decoder_outputs, preference_vector, w_pref, b_pref, w_sig, b_sig):
    p = preference_vector.astype(jnp.float32) @ w_pref + b_pref
    fa1 = p[0, 0] * INFLUENCE_FACTOR
    fa2 = p[0, 1] * INFLUENCE_FACTOR
    p = p.at[:, 0].set(fa1).at[:, 1].set(fa2)
    sig = jax.nn.sigmoid(p @ w_sig + b_sig)
    return decoder_outputs + WEIGHT_FACTOR * sig[:, None, :] * p[:, None, :]


if __name__ == "__main__":
    # Small, forward-consistent shapes.
    B, T = 2, 8          # batch, decoder sequence length
    D_IN, FEAT = 16, 32  # input_dim, feature_dim

    key = jax.random.PRNGKey(0)
    k_dec, k_pref, k_wp, k_bp, k_ws, k_bs = jax.random.split(key, 6)

    decoder_outputs = jax.random.normal(k_dec, (B, T, FEAT), dtype=jnp.float32)
    preference_vector = jax.random.normal(k_pref, (B, D_IN), dtype=jnp.float32)

    # Deterministic parameter init (PyTorch Linear-style uniform bounds).
    bound_p = 1.0 / (D_IN ** 0.5)
    bound_s = 1.0 / (FEAT ** 0.5)
    w_pref = jax.random.uniform(k_wp, (D_IN, FEAT), jnp.float32, -bound_p, bound_p)
    b_pref = jax.random.uniform(k_bp, (1, FEAT), jnp.float32, -bound_p, bound_p)
    w_sig = jax.random.uniform(k_ws, (FEAT, FEAT), jnp.float32, -bound_s, bound_s)
    b_sig = jax.random.uniform(k_bs, (1, FEAT), jnp.float32, -bound_s, bound_s)

    ref = _reference(decoder_outputs, preference_vector,
                     w_pref, b_pref, w_sig, b_sig)
    ref = jax.block_until_ready(ref)

    out = preference_fusion(decoder_outputs, preference_vector,
                            w_pref, b_pref, w_sig, b_sig)
    out = jax.block_until_ready(out)

    assert out.shape == (B, T, FEAT)
    assert jnp.allclose(out, ref, atol=1e-5, rtol=1e-5), "mismatch vs reference"

    print("KERNEL_OK")
</pallas_src>

<mosaic_0001>
module attributes {stable_mosaic.version = 11 : i64} {
  func.func @_fusion_kernel(%arg0: i32, %arg1: memref<2x128xf32, #tpu.memory_space<vmem>>, %arg2: memref<2x2x128xf32, #tpu.memory_space<vmem>>, %arg3: memref<2x2x128xf32, #tpu.memory_space<vmem>>) attributes {dimension_semantics = [#tpu.dimension_semantics<parallel>], iteration_bounds = array<i64: 1>, scalar_prefetch = 0 : i64, scratch_operands = 0 : i64, tpu.core_type = #tpu.core_type<tc>, window_params = [{pipeline_mode = #tpu.pipeline_mode<synchronous>, transform_indices = @transform_0, window_bounds = array<i64: 2, 128>}, {transform_indices = @transform_1, window_bounds = array<i64: 2, 2, 128>}, {transform_indices = @transform_2, window_bounds = array<i64: 2, 2, 128>}]} {
    %c0 = arith.constant 0 : index
    %c0_0 = arith.constant 0 : index
    %c0_1 = arith.constant 0 : index
    %0 = vector.load %arg2[%c0, %c0_0, %c0_1] : memref<2x2x128xf32, #tpu.memory_space<vmem>>, vector<2x2x128xf32>
    %c0_2 = arith.constant 0 : index
    %c0_3 = arith.constant 0 : index
    %1 = vector.load %arg1[%c0_2, %c0_3] : memref<2x128xf32, #tpu.memory_space<vmem>>, vector<2x128xf32>
    %2 = vector.shape_cast %1 : vector<2x128xf32> to vector<2x1x128xf32>
    %3 = vector.broadcast %2 : vector<2x1x128xf32> to vector<2x2x128xf32>
    %4 = arith.addf %0, %3 : vector<2x2x128xf32>
    %c0_4 = arith.constant 0 : index
    %c0_5 = arith.constant 0 : index
    %c0_6 = arith.constant 0 : index
    %5 = vector.load %arg3[%c0_4, %c0_5, %c0_6] : memref<2x2x128xf32, #tpu.memory_space<vmem>>, vector<2x2x128xf32>
    tpu.vector_store %arg3[%c0_4, %c0_5, %c0_6], %4 {strides = array<i32>} : memref<2x2x128xf32, #tpu.memory_space<vmem>>, vector<2x2x128xf32>,
    return
  }
  func.func @transform_0(%arg0: i32) -> (i32, i32) {
    %c0_i32 = arith.constant 0 : i32
    %c0_i32_0 = arith.constant 0 : i32
    %c0_i32_1 = arith.constant 0 : i32
    return %c0_i32, %c0_i32_0 : i32, i32
  }
  func.func @transform_1(%arg0: i32) -> (i32, i32, i32) {
    %c0_i32 = arith.constant 0 : i32
    %c0_i32_0 = arith.constant 0 : i32
    %c0_i32_1 = arith.constant 0 : i32
    return %c0_i32, %arg0, %c0_i32_0 : i32, i32, i32
  }
  func.func @transform_2(%arg0: i32) -> (i32, i32, i32) {
    %c0_i32 = arith.constant 0 : i32
    %c0_i32_0 = arith.constant 0 : i32
    %c0_i32_1 = arith.constant 0 : i32
    return %c0_i32, %arg0, %c0_i32_0 : i32, i32, i32
  }
}

</mosaic_0001>

<llo_original>
// kernel: tpu_custom_call.1
$region0: #{tpu_custom_call.1}
  #allocation0 [shape = 'u32[]', space=smem, size = 0x4, offset = 0x4, fixed_abs, tag = 'smem constant byte address 0x4 - core index']
  #allocation1 [shape = 'u32[144,128]{1,0:T(1,128)}', space=vmem, size = 0x12000, scoped, tag = 'internal scratch']
  %s0 = inlined_call_operand.hbm [shape: f32[2,128], index: 0, kind: input, shape index: {}]
  %s1 = inlined_call_operand.hbm [shape: f32[2,2,128], index: 1, kind: input, shape index: {}]
  %s2 = inlined_call_operand.hbm [shape: f32[2,2,128], index: 2, kind: output, shape index: {}]
  %s3 = sld [smem:[#allocation0]]
  $region26: #{tpu_custom_call.1} parent=0
    _
  %s5 = ssub.s32 1, %s3
  %s6 = scalar_select 0, %s5, %s3
  $region1: #{tpu_custom_call.1} parent=0
    #allocation2 [shape = 'u8[1024]{0}', space=vmem, size = 0x400, scoped, tag = 'input window, operand 0, single buffered']
    #allocation3 [shape = 's32[1]{0}', space=sflag, size = 0x4, scoped, tag = 'scoped memory for tpu_custom_call.1']
    #allocation4 [shape = 's32[1]{0}', space=sflag, size = 0x4, scoped, tag = 'scoped memory for tpu_custom_call.1']
    #allocation5 [shape = 'u8[2048]{0}', space=vmem, size = 0x800, scoped, tag = 'input window, operand 1, single buffered']
    #allocation6 [shape = 's32[1]{0}', space=sflag, size = 0x4, scoped, tag = 'scoped memory for tpu_custom_call.1']
    #allocation7 [shape = 'u8[2048]{0}', space=vmem, size = 0x800, scoped, tag = 'output window, operand 0, single buffered']
    %7 = vsyncpa [#allocation3], 0
    %8 = vsyncpa [#allocation6], 0
    %9 = vsyncpa [#allocation4], 0
    // Predicated region
    $region2: #{tpu_custom_call.1} parent=1 // pred_check
      _
    $region3: #{tpu_custom_call.1} parent=1 // pred_check_branch
      %11 = sbr.rel (0) target = $region5
    $region4: #{tpu_custom_call.1} parent=1 // pred_region
      %s13 = ssub.s32 32, 32
      %14 = vsyncadd [#allocation3], %s13
      %s16 = sshll.u32 [#allocation2], 4
      %s17 = int_to_ptr.vmem [resolvable:$true] %s16
      %19 = dma.hbm_to_vmem [thread:$0]  %s0, 32, %s17, [#allocation3]
    $region5: #{tpu_custom_call.1} parent=1 // pred_fallthru
      _
    // Predicated region
    $region6: #{tpu_custom_call.1} parent=1 // pred_check
      _
    $region7: #{tpu_custom_call.1} parent=1 // pred_check_branch
      %21 = sbr.rel (0) target = $region9
    $region8: #{tpu_custom_call.1} parent=1 // pred_region
      %s23 = ssub.s32 64, 64
      %24 = vsyncadd [#allocation6], %s23
      %s25 = sshll.u32 [#allocation5], 4
      %s26 = int_to_ptr.vmem [resolvable:$true] %s25
      %31 = dma.hbm_to_vmem [thread:$0]  %s1, 64, %s26, [#allocation6], 32, 32, 2
    $region9: #{tpu_custom_call.1} parent=1 // pred_fallthru
      _
    // Predicated region
    $region10: #{tpu_custom_call.1} parent=1 // pred_check
      _
    $region11: #{tpu_custom_call.1} parent=1 // pred_check_branch
      %33 = sbr.rel (0) target = $region13
    $region12: #{tpu_custom_call.1} parent=1 // pred_region
      %34 = dma.done [#allocation3], 32
    $region13: #{tpu_custom_call.1} parent=1 // pred_fallthru
      _
    // Predicated region
    $region14: #{tpu_custom_call.1} parent=1 // pred_check
      _
    $region15: #{tpu_custom_call.1} parent=1 // pred_check_branch
      %36 = sbr.rel (0) target = $region17
    $region16: #{tpu_custom_call.1} parent=1 // pred_region
      %37 = dma.done [#allocation6], 64
    $region17: #{tpu_custom_call.1} parent=1 // pred_fallthru
      _
    %v38 = vld [vmem:[#allocation5] sm:$0x3]
    %v39 = vld [vmem:[#allocation5 + $0x2] sm:$0x3]
    %v40 = vld [vmem:[#allocation2] sm:$0x3]
    %v43 = vunpack.c.l.s4 1966171168
    %v44 = vunpack.c.0.s8 %v43
    %v45 = vlaneseq
    %v46 = vshrl.u32 %v45, 7
    %v47 = vsub.s32 %v44, %v46
    %v48 = vrot.slane %v40, %v47
    %v49 = vcombine.high %v48, %v48
    %v51 = vunpack.c.l.s4 1966171168
    %v52 = vunpack.c.0.s8 %v51
    %v53 = vlaneseq
    %v54 = vshrl.u32 %v53, 7
    %v55 = vsub.s32 %v52, %v54
    %v56 = vrot.slane %v48, %v55
    %v58 = vunpack.c.l.s4 1966171168
    %v59 = vunpack.c.0.s8 %v58
    %v60 = vlaneseq
    %v61 = vshrl.u32 %v60, 7
    %v62 = vsub.s32 %v59, %v61
    %v63 = vrot.slane %v49, %v62
    %v64 = vlaneseq
    %v65 = vshrl.u32 %v64, 7
    %v66 = vsub.s32 0, %v65
    %v67 = vrot.slane %v56, %v66
    %v68 = vlaneseq
    %v69 = vshrl.u32 %v68, 7
    %v70 = vsub.s32 0, %v69
    %v71 = vrot.slane %v63, %v70
    %v74 = vadd.f32 %v38, %v67
    %v75 = vadd.f32 %v39, %v71
    %76 = vst [vmem:[#allocation7] sm:$0x3] %v74
    %77 = vst [vmem:[#allocation7 + $0x2] sm:$0x3] %v75
    // Predicated region
    $region18: #{tpu_custom_call.1} parent=1 // pred_check
      _
    $region19: #{tpu_custom_call.1} parent=1 // pred_check_branch
      %79 = sbr.rel (0) target = $region21
    $region20: #{tpu_custom_call.1} parent=1 // pred_region
      %s81 = ssub.s32 64, 64
      %82 = vsyncadd [#allocation4], %s81
      %s83 = sshll.u32 [#allocation7], 4
      %s84 = int_to_ptr.vmem [resolvable:$true] %s83
      %89 = dma.vmem_to_hbm [thread:$0]  %s84, 64, %s2, [#allocation4], 32, 32, 2
    $region21: #{tpu_custom_call.1} parent=1 // pred_fallthru
      _
    // Predicated region
    $region22: #{tpu_custom_call.1} parent=1 // pred_check
      _
    $region23: #{tpu_custom_call.1} parent=1 // pred_check_branch
      %91 = sbr.rel (0) target = $region25
    $region24: #{tpu_custom_call.1} parent=1 // pred_region
      %92 = dma.done [#allocation4], 64
    $region25: #{tpu_custom_call.1} parent=1 // pred_fallthru
      _
    %93 = vsyncpa [#allocation3], 1
    %94 = vsyncpa [#allocation6], 1
    %95 = vsyncpa [#allocation4], 1

</llo_original>
